<compile_context>
chip_gen: v6e
topology: v6e:2x2x1
jax: 0.10.0
libtpu: 0.0.40
codegen_flags: <defaults>
</compile_context>

<pallas_src>
import math

import numpy as np
import jax
import jax.numpy as jnp
from jax.experimental import pallas as pl
from jax.experimental.pallas import tpu as pltpu

_LANES = 512           # last-dim tile width (multiple of 128 -> unmasked vld/vst)
_MAX_BLOCK_ROWS = 256  # up to 256 x 512 f32 = 512 KiB per input per grid step


def _mae_partial_kernel(x_ref, y_ref, o_ref):
    """One (block_rows, _LANES) tile -> scalar partial sum, broadcast to (8, 128)."""
    s = jnp.sum(jnp.abs(x_ref[...] - y_ref[...]))
    # Lane-dense (8, 128) store (unmasked vst); wrapper reads [0, 0] per block.
    o_ref[...] = jnp.broadcast_to(s, o_ref.shape)


def _round_up(x, m):
    return ((x + m - 1) // m) * m


def calculate_mae_pallas(pred, gt, scale=1.0):
    """pred, gt: arrays of identical shape. Returns the MAE scalar (float32)."""
    assert pred.shape == gt.shape
    x = jnp.asarray(pred, jnp.float32).reshape(-1)
    y = jnp.asarray(gt, jnp.float32).reshape(-1)
    n_elem = x.shape[0]

    rows = max(1, math.ceil(n_elem / _LANES))
    block_rows = min(_MAX_BLOCK_ROWS, _round_up(rows, 8))
    rows_padded = _round_up(rows, block_rows)
    num_tiles = rows_padded // block_rows
    padded_n = rows_padded * _LANES

    if padded_n != n_elem:
        pad = padded_n - n_elem
        x = jnp.pad(x, (0, pad))  # zero padding: |0 - 0| adds nothing to the sum
        y = jnp.pad(y, (0, pad))
    x2d = x.reshape(rows_padded, _LANES)
    y2d = y.reshape(rows_padded, _LANES)

    partials = pl.pallas_call(
        _mae_partial_kernel,
        out_shape=jax.ShapeDtypeStruct((num_tiles * 8, 128), jnp.float32),
        grid=(num_tiles,),
        in_specs=[
            pl.BlockSpec((block_rows, _LANES), lambda i: (i, 0)),
            pl.BlockSpec((block_rows, _LANES), lambda i: (i, 0)),
        ],
        out_specs=pl.BlockSpec((8, 128), lambda i: (i, 0)),
        compiler_params=pltpu.CompilerParams(
            dimension_semantics=("parallel",)),
    )(x2d, y2d)

    total = jnp.sum(partials.reshape(num_tiles, 8 * 128)[:, 0])
    # mean(|p/s - g/s|) == sum(|p - g|) / (numel * s)
    return total / (jnp.float32(n_elem) * jnp.float32(scale))


if __name__ == "__main__":
    # Small example consistent with the module: image-like tensors in [0, 255]
    # with scale=255 (batch=2, channels=4, spatial=16).
    key = jax.random.PRNGKey(0)
    k1, k2 = jax.random.split(key)
    shape = (2, 4, 16, 16)
    scale = 255.0
    pred = jax.random.uniform(k1, shape, jnp.float32, minval=0.0, maxval=255.0)
    gt = jnp.clip(pred + 20.0 * jax.random.normal(k2, shape, jnp.float32),
                  0.0, 255.0)

    out = jax.block_until_ready(calculate_mae_pallas(pred, gt, scale))

    # Pure-JAX reference (same math as calculate_mae_torch with the scale arg).
    ref = jax.block_until_ready(jnp.mean(jnp.abs(pred / scale - gt / scale)))
    if not np.allclose(np.asarray(out), np.asarray(ref), rtol=1e-5, atol=1e-6):
        raise AssertionError(f"mismatch: pallas={out} ref={ref}")

    print("KERNEL_OK")
</pallas_src>

<mosaic_0001>
module attributes {stable_mosaic.version = 11 : i64} {
  func.func @_mae_partial_kernel(%arg0: i32, %arg1: memref<8x512xf32, #tpu.memory_space<vmem>>, %arg2: memref<8x512xf32, #tpu.memory_space<vmem>>, %arg3: memref<8x128xf32, #tpu.memory_space<vmem>>) attributes {dimension_semantics = [#tpu.dimension_semantics<parallel>], iteration_bounds = array<i64: 1>, scalar_prefetch = 0 : i64, scratch_operands = 0 : i64, tpu.core_type = #tpu.core_type<tc>, window_params = [{transform_indices = @transform_0, window_bounds = array<i64: 8, 512>}, {transform_indices = @transform_1, window_bounds = array<i64: 8, 512>}, {transform_indices = @transform_2, window_bounds = array<i64: 8, 128>}]} {
    %c0 = arith.constant 0 : index
    %c0_0 = arith.constant 0 : index
    %0 = vector.load %arg1[%c0, %c0_0] : memref<8x512xf32, #tpu.memory_space<vmem>>, vector<8x512xf32>
    %c0_1 = arith.constant 0 : index
    %c0_2 = arith.constant 0 : index
    %1 = vector.load %arg2[%c0_1, %c0_2] : memref<8x512xf32, #tpu.memory_space<vmem>>, vector<8x512xf32>
    %2 = arith.subf %0, %1 : vector<8x512xf32>
    %3 = math.absf %2 : vector<8x512xf32>
    %4 = vector.shape_cast %3 : vector<8x512xf32> to vector<1x8x512xf32>
    %cst = arith.constant dense<0.000000e+00> : vector<1xf32>
    %5 = vector.multi_reduction <add>, %4, %cst [1, 2] : vector<1x8x512xf32> to vector<1xf32>
    %6 = vector.shape_cast %5 : vector<1xf32> to vector<1x1x1xf32>
    %7 = vector.extract %6[0, 0, 0] : f32 from vector<1x1x1xf32>
    %8 = vector.broadcast %7 : f32 to vector<8x128xf32>
    %c0_3 = arith.constant 0 : index
    %c0_4 = arith.constant 0 : index
    %9 = vector.load %arg3[%c0_3, %c0_4] : memref<8x128xf32, #tpu.memory_space<vmem>>, vector<8x128xf32>
    tpu.vector_store %arg3[%c0_3, %c0_4], %8 {strides = array<i32>} : memref<8x128xf32, #tpu.memory_space<vmem>>, vector<8x128xf32>,
    return
  }
  func.func @transform_0(%arg0: i32) -> (i32, i32) {
    %c0_i32 = arith.constant 0 : i32
    %c0_i32_0 = arith.constant 0 : i32
    return %arg0, %c0_i32 : i32, i32
  }
  func.func @transform_1(%arg0: i32) -> (i32, i32) {
    %c0_i32 = arith.constant 0 : i32
    %c0_i32_0 = arith.constant 0 : i32
    return %arg0, %c0_i32 : i32, i32
  }
  func.func @transform_2(%arg0: i32) -> (i32, i32) {
    %c0_i32 = arith.constant 0 : i32
    %c0_i32_0 = arith.constant 0 : i32
    return %arg0, %c0_i32 : i32, i32
  }
}

</mosaic_0001>

<llo_original>
// kernel: tpu_custom_call.1
$region0: #{tpu_custom_call.1}
  #allocation0 [shape = 'u32[]', space=smem, size = 0x4, offset = 0x4, fixed_abs, tag = 'smem constant byte address 0x4 - core index']
  #allocation1 [shape = 'u32[144,128]{1,0:T(1,128)}', space=vmem, size = 0x12000, scoped, tag = 'internal scratch']
  %s0 = inlined_call_operand.hbm [shape: f32[8,512], index: 0, kind: input, shape index: {}]
  %s1 = inlined_call_operand.hbm [shape: f32[8,512], index: 1, kind: input, shape index: {}]
  %s2 = inlined_call_operand.hbm [shape: f32[8,128], index: 2, kind: output, shape index: {}]
  %s3 = sld [smem:[#allocation0]]
  $region26: #{tpu_custom_call.1} parent=0
    _
  %s5 = ssub.s32 1, %s3
  %s6 = scalar_select 0, %s5, %s3
  $region1: #{tpu_custom_call.1} parent=0
    #allocation2 [shape = 'u8[16384]{0}', space=vmem, size = 0x4000, scoped, tag = 'input window, operand 0, single buffered']
    #allocation3 [shape = 's32[1]{0}', space=sflag, size = 0x4, scoped, tag = 'scoped memory for tpu_custom_call.1']
    #allocation4 [shape = 's32[1]{0}', space=sflag, size = 0x4, scoped, tag = 'scoped memory for tpu_custom_call.1']
    #allocation5 [shape = 'u8[16384]{0}', space=vmem, size = 0x4000, scoped, tag = 'input window, operand 1, single buffered']
    #allocation6 [shape = 's32[1]{0}', space=sflag, size = 0x4, scoped, tag = 'scoped memory for tpu_custom_call.1']
    #allocation7 [shape = 'u8[4096]{0}', space=vmem, size = 0x1000, scoped, tag = 'output window, operand 0, single buffered']
    %7 = vsyncpa [#allocation3], 0
    %8 = vsyncpa [#allocation6], 0
    %9 = vsyncpa [#allocation4], 0
    // Predicated region
    $region2: #{tpu_custom_call.1} parent=1 // pred_check
      _
    $region3: #{tpu_custom_call.1} parent=1 // pred_check_branch
      %11 = sbr.rel (0) target = $region5
    $region4: #{tpu_custom_call.1} parent=1 // pred_region
      %s13 = ssub.s32 512, 512
      %14 = vsyncadd [#allocation3], %s13
      %s16 = sshll.u32 [#allocation2], 4
      %s17 = int_to_ptr.vmem [resolvable:$true] %s16
      %19 = dma.hbm_to_vmem [thread:$0]  %s0, 512, %s17, [#allocation3]
    $region5: #{tpu_custom_call.1} parent=1 // pred_fallthru
      _
    // Predicated region
    $region6: #{tpu_custom_call.1} parent=1 // pred_check
      _
    $region7: #{tpu_custom_call.1} parent=1 // pred_check_branch
      %21 = sbr.rel (0) target = $region9
    $region8: #{tpu_custom_call.1} parent=1 // pred_region
      %s23 = ssub.s32 512, 512
      %24 = vsyncadd [#allocation6], %s23
      %s26 = sshll.u32 [#allocation5], 4
      %s27 = int_to_ptr.vmem [resolvable:$true] %s26
      %29 = dma.hbm_to_vmem [thread:$0]  %s1, 512, %s27, [#allocation6]
    $region9: #{tpu_custom_call.1} parent=1 // pred_fallthru
      _
    // Predicated region
    $region10: #{tpu_custom_call.1} parent=1 // pred_check
      _
    $region11: #{tpu_custom_call.1} parent=1 // pred_check_branch
      %31 = sbr.rel (0) target = $region13
    $region12: #{tpu_custom_call.1} parent=1 // pred_region
      %32 = dma.done [#allocation3], 512
    $region13: #{tpu_custom_call.1} parent=1 // pred_fallthru
      _
    // Predicated region
    $region14: #{tpu_custom_call.1} parent=1 // pred_check
      _
    $region15: #{tpu_custom_call.1} parent=1 // pred_check_branch
      %34 = sbr.rel (0) target = $region17
    $region16: #{tpu_custom_call.1} parent=1 // pred_region
      %35 = dma.done [#allocation6], 512
    $region17: #{tpu_custom_call.1} parent=1 // pred_fallthru
      _
    %v36 = vld [vmem:[#allocation2] sm:$0xff]
    %v37 = vld [vmem:[#allocation2 + $0x8] sm:$0xff]
    %v38 = vld [vmem:[#allocation2 + $0x10] sm:$0xff]
    %v39 = vld [vmem:[#allocation2 + $0x18] sm:$0xff]
    %v40 = vld [vmem:[#allocation5] sm:$0xff]
    %v41 = vld [vmem:[#allocation5 + $0x8] sm:$0xff]
    %v42 = vld [vmem:[#allocation5 + $0x10] sm:$0xff]
    %v43 = vld [vmem:[#allocation5 + $0x18] sm:$0xff]
    %v44 = vsub.f32 %v36, %v40
    %v45 = vsub.f32 %v37, %v41
    %v46 = vsub.f32 %v38, %v42
    %v47 = vsub.f32 %v39, %v43
    %v48 = vand.u32 2147483647, %v44
    %v49 = vand.u32 2147483647, %v45
    %v50 = vand.u32 2147483647, %v46
    %v51 = vand.u32 2147483647, %v47
    %v52 = vadd.f32 %v48, %v49
    %v53 = vadd.f32 %v52, %v50
    %v54 = vadd.f32 %v53, %v51
    %55 = vadd.xlane.f32.xlu0 %v54
    %v56 = vpop.xlane.xlu0 %55
    %v57 = vrot.slane %v56, 4
    %v58 = vadd.f32 %v56, %v57
    %v59 = vrot.slane %v58, 2
    %v60 = vadd.f32 %v58, %v59
    %v61 = vrot.slane %v60, 1
    %v62 = vadd.f32 %v60, %v61
    %s63 = vtos %v62
    %v64 = vstv %s63
    %65 = vst [vmem:[#allocation7] sm:$0xff] %v64
    // Predicated region
    $region18: #{tpu_custom_call.1} parent=1 // pred_check
      _
    $region19: #{tpu_custom_call.1} parent=1 // pred_check_branch
      %67 = sbr.rel (0) target = $region21
    $region20: #{tpu_custom_call.1} parent=1 // pred_region
      %s69 = ssub.s32 128, 128
      %70 = vsyncadd [#allocation4], %s69
      %s72 = sshll.u32 [#allocation7], 4
      %s73 = int_to_ptr.vmem [resolvable:$true] %s72
      %75 = dma.vmem_to_hbm [thread:$0]  %s73, 128, %s2, [#allocation4]
    $region21: #{tpu_custom_call.1} parent=1 // pred_fallthru
      _
    // Predicated region
    $region22: #{tpu_custom_call.1} parent=1 // pred_check
      _
    $region23: #{tpu_custom_call.1} parent=1 // pred_check_branch
      %77 = sbr.rel (0) target = $region25
    $region24: #{tpu_custom_call.1} parent=1 // pred_region
      %78 = dma.done [#allocation4], 128
    $region25: #{tpu_custom_call.1} parent=1 // pred_fallthru
      _
    %79 = vsyncpa [#allocation3], 1
    %80 = vsyncpa [#allocation6], 1
    %81 = vsyncpa [#allocation4], 1

</llo_original>
